<compile_context>
chip_gen: v5e
topology: v5e:2x2
jax: 0.10.0
libtpu: 0.0.40
codegen_flags: <defaults>
</compile_context>

<pallas_src>
import functools

import jax
import jax.numpy as jnp
from jax.experimental import pallas as pl
from jax.experimental.pallas import tpu as pltpu

LANE = 128
SUBLANE = 8


def _round_up(n, m):
    return ((n + m - 1) // m) * m


def _pad2(a, rows, cols):
    """Zero-pad a 2-D array up to [rows, cols] (no-op if already that shape)."""
    if a.shape == (rows, cols):
        return a
    return jnp.zeros((rows, cols), a.dtype).at[: a.shape[0], : a.shape[1]].set(a)


# ----------------------------------------------------------------------------
# In-kernel helper: Linear -> ReLU -> Linear -> ReLU -> Linear.
# Weight refs are [in, out]; biases [1, out] (broadcast add).
# ----------------------------------------------------------------------------
def _mlp3(x, w1, b1, w2, b2, w3, b3):
    h = jnp.maximum(
        jnp.dot(x, w1[...], preferred_element_type=jnp.float32) + b1[...], 0.0)
    h = jnp.maximum(
        jnp.dot(h, w2[...], preferred_element_type=jnp.float32) + b2[...], 0.0)
    return jnp.dot(h, w3[...], preferred_element_type=jnp.float32) + b3[...]


# ----------------------------------------------------------------------------
# Fused CIC kernels.
#   [se; nse] = state_net(stack([state, next_state], axis=0))   (one pass)
#   key       = pred_net(concat(se, nse))   (single K=2*Sp matmul in layer 1)
#   query     = skill_net(skill)            (proj variant only)
# ----------------------------------------------------------------------------
def _cic_kernel_proj(s_ref, ns_ref, z_ref,
                     sw1, sb1, sw2, sb2, sw3, sb3,
                     kw1, kb1, kw2, kb2, kw3, kb3,
                     pw1, pb1, pw2, pb2, pw3, pb3,
                     qk_ref):
    tm = s_ref.shape[0]
    x2 = jnp.concatenate([s_ref[...], ns_ref[...]], axis=0)        # (2*tm, D)
    e2 = _mlp3(x2, sw1, sb1, sw2, sb2, sw3, sb3)                   # (2*tm, Sp)
    se_nse = jnp.concatenate([e2[:tm], e2[tm:]], axis=-1)          # (tm, 2*Sp)

    h = jnp.maximum(
        jnp.dot(se_nse, pw1[...], preferred_element_type=jnp.float32)
        + pb1[...], 0.0)
    h = jnp.maximum(
        jnp.dot(h, pw2[...], preferred_element_type=jnp.float32) + pb2[...], 0.0)
    key = jnp.dot(h, pw3[...], preferred_element_type=jnp.float32) + pb3[...]

    query = _mlp3(z_ref[...], kw1, kb1, kw2, kb2, kw3, kb3)

    # One lane-dense output slab: query in lanes [0, Sp), key in [Sp, 2*Sp).
    qk_ref[...] = jnp.concatenate([query, key], axis=-1).astype(qk_ref.dtype)


def _cic_kernel_noproj(s_ref, ns_ref,
                       sw1, sb1, sw2, sb2, sw3, sb3,
                       pw1, pb1, pw2, pb2, pw3, pb3,
                       k_ref):
    tm = s_ref.shape[0]
    x2 = jnp.concatenate([s_ref[...], ns_ref[...]], axis=0)
    e2 = _mlp3(x2, sw1, sb1, sw2, sb2, sw3, sb3)
    se_nse = jnp.concatenate([e2[:tm], e2[tm:]], axis=-1)

    h = jnp.maximum(
        jnp.dot(se_nse, pw1[...], preferred_element_type=jnp.float32)
        + pb1[...], 0.0)
    h = jnp.maximum(
        jnp.dot(h, pw2[...], preferred_element_type=jnp.float32) + pb2[...], 0.0)
    k_ref[...] = (jnp.dot(h, pw3[...], preferred_element_type=jnp.float32)
                  + pb3[...]).astype(k_ref.dtype)


# ----------------------------------------------------------------------------
# Parameter construction (deterministic, in-script). Weights stored [in, out]
# (transpose of nn.Linear) so the kernel computes y = x @ W + b directly.
# ----------------------------------------------------------------------------
def _init_mlp3_params(key, d_in, hidden, d_out):
    kw1, kb1, kw2, kb2, kw3, kb3 = jax.random.split(key, 6)

    def lin_w(k, fan_in, fan_out):
        # TODO(synk): stand-in for utils.weight_init (orthogonal); scaled normal.
        return (jax.random.normal(k, (fan_in, fan_out), jnp.float32)
                / jnp.sqrt(jnp.float32(fan_in)))

    def lin_b(k, fan_in, fan_out):
        bound = 1.0 / jnp.sqrt(jnp.float32(fan_in))
        return jax.random.uniform(k, (1, fan_out), jnp.float32, -bound, bound)

    return {
        "w1": lin_w(kw1, d_in, hidden), "b1": lin_b(kb1, d_in, hidden),
        "w2": lin_w(kw2, hidden, hidden), "b2": lin_b(kb2, hidden, hidden),
        "w3": lin_w(kw3, hidden, d_out), "b3": lin_b(kb3, hidden, d_out),
    }


def init_cic_params(key, obs_dim, skill_dim, hidden_dim, project_skill):
    k1, k2, k3, k4 = jax.random.split(key, 4)
    return {
        "state_net": _init_mlp3_params(k1, obs_dim, hidden_dim, skill_dim),
        # next_state_net exists in __init__ but forward never uses it (parity).
        "next_state_net": _init_mlp3_params(k2, obs_dim, hidden_dim, skill_dim),
        "pred_net": _init_mlp3_params(k3, 2 * skill_dim, hidden_dim, skill_dim),
        "skill_net": (_init_mlp3_params(k4, skill_dim, hidden_dim, skill_dim)
                      if project_skill else None),
    }


def pack_cic_params(params, obs_dim, skill_dim, hidden_dim):
    """Pad hidden/output lanes to 128 (zeros -> exact) but keep first-layer K
    (true input feature dims) unpadded; fold pred_net's concat into a single
    stacked (2*Sp, Hp) first-layer weight. Done once, off the hot path."""
    Hp = _round_up(hidden_dim, LANE)
    Sp = _round_up(skill_dim, LANE)

    def pad_mlp(p, d_in):
        return {
            "w1": _pad2(p["w1"], d_in, Hp), "b1": _pad2(p["b1"], 1, Hp),
            "w2": _pad2(p["w2"], Hp, Hp),   "b2": _pad2(p["b2"], 1, Hp),
            "w3": _pad2(p["w3"], Hp, Sp),   "b3": _pad2(p["b3"], 1, Sp),
        }

    pp = params["pred_net"]
    # concat(se, nse) @ W1 == [se | nse] @ [W1_top ; W1_bot]; each half's K is
    # padded to Sp (matching se/nse's zero-padded lanes) -> one K=2*Sp matmul.
    pw1 = jnp.concatenate([_pad2(pp["w1"][:skill_dim], Sp, Hp),
                           _pad2(pp["w1"][skill_dim:], Sp, Hp)], axis=0)
    return {
        "state": pad_mlp(params["state_net"], obs_dim),
        "pred": {
            "w1": pw1, "b1": _pad2(pp["b1"], 1, Hp),
            "w2": _pad2(pp["w2"], Hp, Hp), "b2": _pad2(pp["b2"], 1, Hp),
            "w3": _pad2(pp["w3"], Hp, Sp), "b3": _pad2(pp["b3"], 1, Sp),
        },
        "skill": (pad_mlp(params["skill_net"], skill_dim)
                  if params["skill_net"] is not None else None),
    }


# ----------------------------------------------------------------------------
# CIC forward — one fused pallas_call (state_net used for BOTH state and
# next_state; next_state_net unused, matching the PyTorch forward).
# ----------------------------------------------------------------------------
def cic_forward(packed, state, next_state, skill, *, skill_dim):
    B, obs_dim = state.shape
    skill_feat = skill.shape[1]
    sp, pp = packed["state"], packed["pred"]
    Hp = sp["w1"].shape[1]
    Sp = sp["w3"].shape[1]

    # Batch tiling (no batch-padding copy; ragged last tile is row-independent).
    if B <= 16:
        tm = _round_up(B, SUBLANE)                 # single resident tile
    elif B <= 1024:
        tm = _round_up(pl.cdiv(B, 2), SUBLANE)     # >=2 tiles -> both v7x TCs
    else:
        tm = 512                                   # large-batch streaming tiles
    grid = (pl.cdiv(B, tm),)

    state_w = [sp["w1"], sp["b1"], sp["w2"], sp["b2"], sp["w3"], sp["b3"]]
    pred_w = [pp["w1"], pp["b1"], pp["w2"], pp["b2"], pp["w3"], pp["b3"]]
    proj = packed["skill"] is not None
    if proj:
        kp = packed["skill"]
        skill_w = [kp["w1"], kp["b1"], kp["w2"], kp["b2"], kp["w3"], kp["b3"]]
    else:
        skill_w = []
    weight_arrs = state_w + skill_w + pred_w

    weight_bytes = sum(int(a.size) * a.dtype.itemsize for a in weight_arrs)
    # Single-buffer resident weights (constant index_map -> never re-DMAed)
    # once they are big enough to matter; keeps hidden~1024 configs inside
    # v5e's 16 MiB / v7x's 32 MiB scoped-VMEM defaults.
    w_mode = pl.Buffered(1) if weight_bytes > (2 << 20) else None
    wbuf = 1 if w_mode is not None else 2

    def act_spec(cols):
        return pl.BlockSpec((tm, cols), lambda i: (i, 0))

    def w_spec(arr):
        if w_mode is None:
            return pl.BlockSpec(arr.shape, lambda i: (0, 0))
        return pl.BlockSpec(arr.shape, lambda i: (0, 0), pipeline_mode=w_mode)

    # Rough VMEM budget (weights + double-buffered activations + intermediates),
    # clamped so the request is valid on every TPU generation.
    act_bytes = 4 * tm * (2 * obs_dim + skill_feat + 2 * Sp) * 2
    inter_bytes = 4 * tm * (3 * Hp + 4 * Sp)
    vmem_limit = int(min(64 << 20,
                         max(32 << 20, wbuf * weight_bytes + act_bytes + inter_bytes)))
    cparams = pltpu.CompilerParams(dimension_semantics=("parallel",),
                                   vmem_limit_bytes=vmem_limit)

    if proj:
        in_specs = ([act_spec(obs_dim), act_spec(obs_dim), act_spec(skill_feat)]
                    + [w_spec(a) for a in weight_arrs])
        qk = pl.pallas_call(
            _cic_kernel_proj,
            out_shape=jax.ShapeDtypeStruct((B, 2 * Sp), jnp.float32),
            grid_spec=pltpu.PrefetchScalarGridSpec(
                num_scalar_prefetch=0, grid=grid,
                in_specs=in_specs,
                out_specs=pl.BlockSpec((tm, 2 * Sp), lambda i: (i, 0))),
            compiler_params=cparams,
        )(state, next_state, skill, *weight_arrs)
        query = qk[:, :skill_dim]
        key = qk[:, Sp:Sp + skill_dim]
    else:
        in_specs = ([act_spec(obs_dim), act_spec(obs_dim)]
                    + [w_spec(a) for a in weight_arrs])
        k_pad = pl.pallas_call(
            _cic_kernel_noproj,
            out_shape=jax.ShapeDtypeStruct((B, Sp), jnp.float32),
            grid_spec=pltpu.PrefetchScalarGridSpec(
                num_scalar_prefetch=0, grid=grid,
                in_specs=in_specs,
                out_specs=pl.BlockSpec((tm, Sp), lambda i: (i, 0))),
            compiler_params=cparams,
        )(state, next_state, *weight_arrs)
        query = skill  # nn.Identity()
        key = k_pad[:, :skill_dim]

    return query, key


# ----------------------------------------------------------------------------
# Pure-JAX reference (unpadded params) for correctness checking.
# ----------------------------------------------------------------------------
def _mlp3_ref(x, p):
    hi = jax.lax.Precision.HIGHEST
    h1 = jnp.maximum(jnp.dot(x, p["w1"], precision=hi) + p["b1"], 0.0)
    h2 = jnp.maximum(jnp.dot(h1, p["w2"], precision=hi) + p["b2"], 0.0)
    return jnp.dot(h2, p["w3"], precision=hi) + p["b3"]


def cic_forward_ref(params, state, next_state, skill):
    s = _mlp3_ref(state, params["state_net"])
    ns = _mlp3_ref(next_state, params["state_net"])
    q = (_mlp3_ref(skill, params["skill_net"])
         if params["skill_net"] is not None else skill)
    k = _mlp3_ref(jnp.concatenate([s, ns], axis=1), params["pred_net"])
    return q, k


if __name__ == "__main__":
    obs_dim, skill_dim, hidden_dim = 24, 8, 32
    batch = 8

    root = jax.random.PRNGKey(0)
    k_params, k_s, k_ns, k_z = jax.random.split(root, 4)

    state = jax.random.normal(k_s, (batch, obs_dim), jnp.float32)
    next_state = jax.random.normal(k_ns, (batch, obs_dim), jnp.float32)
    skill = jax.random.normal(k_z, (batch, skill_dim), jnp.float32)

    fwd = jax.jit(functools.partial(cic_forward, skill_dim=skill_dim))

    for project_skill in (True, False):
        params = init_cic_params(k_params, obs_dim, skill_dim, hidden_dim,
                                 project_skill)
        packed = pack_cic_params(params, obs_dim, skill_dim, hidden_dim)

        query, key = fwd(packed, state, next_state, skill)
        jax.block_until_ready((query, key))

        q_ref, k_ref = cic_forward_ref(params, state, next_state, skill)
        assert query.shape == q_ref.shape and key.shape == (batch, skill_dim)
        assert jnp.allclose(query, q_ref, atol=1e-3, rtol=1e-3), \
            float(jnp.max(jnp.abs(query - q_ref)))
        assert jnp.allclose(key, k_ref, atol=1e-3, rtol=1e-3), \
            float(jnp.max(jnp.abs(key - k_ref)))

    print("KERNEL_OK")
</pallas_src>

<mosaic_0001>
module attributes {stable_mosaic.version = 11 : i64} {
  func.func @_cic_kernel_proj(%arg0: i32, %arg1: memref<8x24xf32, #tpu.memory_space<vmem>>, %arg2: memref<8x24xf32, #tpu.memory_space<vmem>>, %arg3: memref<8x8xf32, #tpu.memory_space<vmem>>, %arg4: memref<24x128xf32, #tpu.memory_space<vmem>>, %arg5: memref<1x128xf32, #tpu.memory_space<vmem>>, %arg6: memref<128x128xf32, #tpu.memory_space<vmem>>, %arg7: memref<1x128xf32, #tpu.memory_space<vmem>>, %arg8: memref<128x128xf32, #tpu.memory_space<vmem>>, %arg9: memref<1x128xf32, #tpu.memory_space<vmem>>, %arg10: memref<8x128xf32, #tpu.memory_space<vmem>>, %arg11: memref<1x128xf32, #tpu.memory_space<vmem>>, %arg12: memref<128x128xf32, #tpu.memory_space<vmem>>, %arg13: memref<1x128xf32, #tpu.memory_space<vmem>>, %arg14: memref<128x128xf32, #tpu.memory_space<vmem>>, %arg15: memref<1x128xf32, #tpu.memory_space<vmem>>, %arg16: memref<256x128xf32, #tpu.memory_space<vmem>>, %arg17: memref<1x128xf32, #tpu.memory_space<vmem>>, %arg18: memref<128x128xf32, #tpu.memory_space<vmem>>, %arg19: memref<1x128xf32, #tpu.memory_space<vmem>>, %arg20: memref<128x128xf32, #tpu.memory_space<vmem>>, %arg21: memref<1x128xf32, #tpu.memory_space<vmem>>, %arg22: memref<8x256xf32, #tpu.memory_space<vmem>>) attributes {dimension_semantics = [#tpu.dimension_semantics<parallel>], iteration_bounds = array<i64: 1>, scalar_prefetch = 0 : i64, scratch_operands = 0 : i64, tpu.core_type = #tpu.core_type<tc>, window_params = [{transform_indices = @transform_0, window_bounds = array<i64: 8, 24>}, {transform_indices = @transform_1, window_bounds = array<i64: 8, 24>}, {transform_indices = @transform_2, window_bounds = array<i64: 8, 8>}, {pipeline_mode = #tpu.pipeline_mode<synchronous>, transform_indices = @transform_3, window_bounds = array<i64: 24, 128>}, {pipeline_mode = #tpu.pipeline_mode<synchronous>, transform_indices = @transform_4, window_bounds = array<i64: 1, 128>}, {pipeline_mode = #tpu.pipeline_mode<synchronous>, transform_indices = @transform_5, window_bounds = array<i64: 128, 128>}, {pipeline_mode = #tpu.pipeline_mode<synchronous>, transform_indices = @transform_6, window_bounds = array<i64: 1, 128>}, {pipeline_mode = #tpu.pipeline_mode<synchronous>, transform_indices = @transform_7, window_bounds = array<i64: 128, 128>}, {pipeline_mode = #tpu.pipeline_mode<synchronous>, transform_indices = @transform_8, window_bounds = array<i64: 1, 128>}, {pipeline_mode = #tpu.pipeline_mode<synchronous>, transform_indices = @transform_9, window_bounds = array<i64: 8, 128>}, {pipeline_mode = #tpu.pipeline_mode<synchronous>, transform_indices = @transform_10, window_bounds = array<i64: 1, 128>}, {pipeline_mode = #tpu.pipeline_mode<synchronous>, transform_indices = @transform_11, window_bounds = array<i64: 128, 128>}, {pipeline_mode = #tpu.pipeline_mode<synchronous>, transform_indices = @transform_12, window_bounds = array<i64: 1, 128>}, {pipeline_mode = #tpu.pipeline_mode<synchronous>, transform_indices = @transform_13, window_bounds = array<i64: 128, 128>}, {pipeline_mode = #tpu.pipeline_mode<synchronous>, transform_indices = @transform_14, window_bounds = array<i64: 1, 128>}, {pipeline_mode = #tpu.pipeline_mode<synchronous>, transform_indices = @transform_15, window_bounds = array<i64: 256, 128>}, {pipeline_mode = #tpu.pipeline_mode<synchronous>, transform_indices = @transform_16, window_bounds = array<i64: 1, 128>}, {pipeline_mode = #tpu.pipeline_mode<synchronous>, transform_indices = @transform_17, window_bounds = array<i64: 128, 128>}, {pipeline_mode = #tpu.pipeline_mode<synchronous>, transform_indices = @transform_18, window_bounds = array<i64: 1, 128>}, {pipeline_mode = #tpu.pipeline_mode<synchronous>, transform_indices = @transform_19, window_bounds = array<i64: 128, 128>}, {pipeline_mode = #tpu.pipeline_mode<synchronous>, transform_indices = @transform_20, window_bounds = array<i64: 1, 128>}, {transform_indices = @transform_21, window_bounds = array<i64: 8, 256>}]} {
    %c0 = arith.constant 0 : index
    %c0_0 = arith.constant 0 : index
    %0 = vector.load %arg1[%c0, %c0_0] : memref<8x24xf32, #tpu.memory_space<vmem>>, vector<8x24xf32>
    %c0_1 = arith.constant 0 : index
    %c0_2 = arith.constant 0 : index
    %1 = vector.load %arg2[%c0_1, %c0_2] : memref<8x24xf32, #tpu.memory_space<vmem>>, vector<8x24xf32>
    %2 = tpu.concatenate %0, %1 in 0 : vector<8x24xf32>, vector<8x24xf32> -> vector<16x24xf32>
    %c0_3 = arith.constant 0 : index
    %c0_4 = arith.constant 0 : index
    %3 = vector.load %arg4[%c0_3, %c0_4] : memref<24x128xf32, #tpu.memory_space<vmem>>, vector<24x128xf32>
    %cst = arith.constant dense<0.000000e+00> : vector<16x128xf32>
    %4 = tpu.matmul %2, %3, %cst {dimension_numbers = #tpu.dot_dimension_numbers<[1], [0], [0], [1], [0, 0, 1, 1], [], []>} : vector<16x24xf32>, vector<24x128xf32>, vector<16x128xf32> -> vector<16x128xf32>
    %c0_5 = arith.constant 0 : index
    %c0_6 = arith.constant 0 : index
    %5 = vector.load %arg5[%c0_5, %c0_6] : memref<1x128xf32, #tpu.memory_space<vmem>>, vector<1x128xf32>
    %6 = vector.broadcast %5 : vector<1x128xf32> to vector<16x128xf32>
    %7 = arith.addf %4, %6 : vector<16x128xf32>
    %cst_7 = arith.constant 0.000000e+00 : f32
    %8 = vector.broadcast %cst_7 : f32 to vector<16x128xf32>
    %9 = arith.maximumf %7, %8 : vector<16x128xf32>
    %c0_8 = arith.constant 0 : index
    %c0_9 = arith.constant 0 : index
    %10 = vector.load %arg6[%c0_8, %c0_9] : memref<128x128xf32, #tpu.memory_space<vmem>>, vector<128x128xf32>
    %cst_10 = arith.constant dense<0.000000e+00> : vector<16x128xf32>
    %11 = tpu.matmul %9, %10, %cst_10 {dimension_numbers = #tpu.dot_dimension_numbers<[1], [0], [0], [1], [0, 0, 1, 1], [], []>} : vector<16x128xf32>, vector<128x128xf32>, vector<16x128xf32> -> vector<16x128xf32>
    %c0_11 = arith.constant 0 : index
    %c0_12 = arith.constant 0 : index
    %12 = vector.load %arg7[%c0_11, %c0_12] : memref<1x128xf32, #tpu.memory_space<vmem>>, vector<1x128xf32>
    %13 = vector.broadcast %12 : vector<1x128xf32> to vector<16x128xf32>
    %14 = arith.addf %11, %13 : vector<16x128xf32>
    %cst_13 = arith.constant 0.000000e+00 : f32
    %15 = vector.broadcast %cst_13 : f32 to vector<16x128xf32>
    %16 = arith.maximumf %14, %15 : vector<16x128xf32>
    %c0_14 = arith.constant 0 : index
    %c0_15 = arith.constant 0 : index
    %17 = vector.load %arg8[%c0_14, %c0_15] : memref<128x128xf32, #tpu.memory_space<vmem>>, vector<128x128xf32>
    %cst_16 = arith.constant dense<0.000000e+00> : vector<16x128xf32>
    %18 = tpu.matmul %16, %17, %cst_16 {dimension_numbers = #tpu.dot_dimension_numbers<[1], [0], [0], [1], [0, 0, 1, 1], [], []>} : vector<16x128xf32>, vector<128x128xf32>, vector<16x128xf32> -> vector<16x128xf32>
    %c0_17 = arith.constant 0 : index
    %c0_18 = arith.constant 0 : index
    %19 = vector.load %arg9[%c0_17, %c0_18] : memref<1x128xf32, #tpu.memory_space<vmem>>, vector<1x128xf32>
    %20 = vector.broadcast %19 : vector<1x128xf32> to vector<16x128xf32>
    %21 = arith.addf %18, %20 : vector<16x128xf32>
    %22 = vector.extract_strided_slice %21 {offsets = [0, 0], sizes = [8, 128], strides = [1, 1]} : vector<16x128xf32> to vector<8x128xf32>
    %23 = vector.extract_strided_slice %21 {offsets = [8, 0], sizes = [8, 128], strides = [1, 1]} : vector<16x128xf32> to vector<8x128xf32>
    %24 = tpu.concatenate %22, %23 in 1 : vector<8x128xf32>, vector<8x128xf32> -> vector<8x256xf32>
    %c0_19 = arith.constant 0 : index
    %c0_20 = arith.constant 0 : index
    %25 = vector.load %arg16[%c0_19, %c0_20] : memref<256x128xf32, #tpu.memory_space<vmem>>, vector<256x128xf32>
    %cst_21 = arith.constant dense<0.000000e+00> : vector<8x128xf32>
    %26 = tpu.matmul %24, %25, %cst_21 {dimension_numbers = #tpu.dot_dimension_numbers<[1], [0], [0], [1], [0, 0, 1, 1], [], []>} : vector<8x256xf32>, vector<256x128xf32>, vector<8x128xf32> -> vector<8x128xf32>
    %c0_22 = arith.constant 0 : index
    %c0_23 = arith.constant 0 : index
    %27 = vector.load %arg17[%c0_22, %c0_23] : memref<1x128xf32, #tpu.memory_space<vmem>>, vector<1x128xf32>
    %28 = vector.broadcast %27 : vector<1x128xf32> to vector<8x128xf32>
    %29 = arith.addf %26, %28 : vector<8x128xf32>
    %cst_24 = arith.constant 0.000000e+00 : f32
    %30 = vector.broadcast %cst_24 : f32 to vector<8x128xf32>
    %31 = arith.maximumf %29, %30 : vector<8x128xf32>
    %c0_25 = arith.constant 0 : index
    %c0_26 = arith.constant 0 : index
    %32 = vector.load %arg18[%c0_25, %c0_26] : memref<128x128xf32, #tpu.memory_space<vmem>>, vector<128x128xf32>
    %cst_27 = arith.constant dense<0.000000e+00> : vector<8x128xf32>
    %33 = tpu.matmul %31, %32, %cst_27 {dimension_numbers = #tpu.dot_dimension_numbers<[1], [0], [0], [1], [0, 0, 1, 1], [], []>} : vector<8x128xf32>, vector<128x128xf32>, vector<8x128xf32> -> vector<8x128xf32>
    %c0_28 = arith.constant 0 : index
    %c0_29 = arith.constant 0 : index
    %34 = vector.load %arg19[%c0_28, %c0_29] : memref<1x128xf32, #tpu.memory_space<vmem>>, vector<1x128xf32>
    %35 = vector.broadcast %34 : vector<1x128xf32> to vector<8x128xf32>
    %36 = arith.addf %33, %35 : vector<8x128xf32>
    %cst_30 = arith.constant 0.000000e+00 : f32
    %37 = vector.broadcast %cst_30 : f32 to vector<8x128xf32>
    %38 = arith.maximumf %36, %37 : vector<8x128xf32>
    %c0_31 = arith.constant 0 : index
    %c0_32 = arith.constant 0 : index
    %39 = vector.load %arg20[%c0_31, %c0_32] : memref<128x128xf32, #tpu.memory_space<vmem>>, vector<128x128xf32>
    %cst_33 = arith.constant dense<0.000000e+00> : vector<8x128xf32>
    %40 = tpu.matmul %38, %39, %cst_33 {dimension_numbers = #tpu.dot_dimension_numbers<[1], [0], [0], [1], [0, 0, 1, 1], [], []>} : vector<8x128xf32>, vector<128x128xf32>, vector<8x128xf32> -> vector<8x128xf32>
    %c0_34 = arith.constant 0 : index
    %c0_35 = arith.constant 0 : index
    %41 = vector.load %arg21[%c0_34, %c0_35] : memref<1x128xf32, #tpu.memory_space<vmem>>, vector<1x128xf32>
    %42 = vector.broadcast %41 : vector<1x128xf32> to vector<8x128xf32>
    %43 = arith.addf %40, %42 : vector<8x128xf32>
    %c0_36 = arith.constant 0 : index
    %c0_37 = arith.constant 0 : index
    %44 = vector.load %arg3[%c0_36, %c0_37] : memref<8x8xf32, #tpu.memory_space<vmem>>, vector<8x8xf32>
    %c0_38 = arith.constant 0 : index
    %c0_39 = arith.constant 0 : index
    %45 = vector.load %arg10[%c0_38, %c0_39] : memref<8x128xf32, #tpu.memory_space<vmem>>, vector<8x128xf32>
    %cst_40 = arith.constant dense<0.000000e+00> : vector<8x128xf32>
    %46 = tpu.matmul %44, %45, %cst_40 {dimension_numbers = #tpu.dot_dimension_numbers<[1], [0], [0], [1], [0, 0, 1, 1], [], []>} : vector<8x8xf32>, vector<8x128xf32>, vector<8x128xf32> -> vector<8x128xf32>
    %c0_41 = arith.constant 0 : index
    %c0_42 = arith.constant 0 : index
    %47 = vector.load %arg11[%c0_41, %c0_42] : memref<1x128xf32, #tpu.memory_space<vmem>>, vector<1x128xf32>
    %48 = vector.broadcast %47 : vector<1x128xf32> to vector<8x128xf32>
    %49 = arith.addf %46, %48 : vector<8x128xf32>
    %cst_43 = arith.constant 0.000000e+00 : f32
    %50 = vector.broadcast %cst_43 : f32 to vector<8x128xf32>
    %51 = arith.maximumf %49, %50 : vector<8x128xf32>
    %c0_44 = arith.constant 0 : index
    %c0_45 = arith.constant 0 : index
    %52 = vector.load %arg12[%c0_44, %c0_45] : memref<128x128xf32, #tpu.memory_space<vmem>>, vector<128x128xf32>
    %cst_46 = arith.constant dense<0.000000e+00> : vector<8x128xf32>
    %53 = tpu.matmul %51, %52, %cst_46 {dimension_numbers = #tpu.dot_dimension_numbers<[1], [0], [0], [1], [0, 0, 1, 1], [], []>} : vector<8x128xf32>, vector<128x128xf32>, vector<8x128xf32> -> vector<8x128xf32>
    %c0_47 = arith.constant 0 : index
    %c0_48 = arith.constant 0 : index
    %54 = vector.load %arg13[%c0_47, %c0_48] : memref<1x128xf32, #tpu.memory_space<vmem>>, vector<1x128xf32>
    %55 = vector.broadcast %54 : vector<1x128xf32> to vector<8x128xf32>
    %56 = arith.addf %53, %55 : vector<8x128xf32>
    %cst_49 = arith.constant 0.000000e+00 : f32
    %57 = vector.broadcast %cst_49 : f32 to vector<8x128xf32>
    %58 = arith.maximumf %56, %57 : vector<8x128xf32>
    %c0_50 = arith.constant 0 : index
    %c0_51 = arith.constant 0 : index
    %59 = vector.load %arg14[%c0_50, %c0_51] : memref<128x128xf32, #tpu.memory_space<vmem>>, vector<128x128xf32>
    %cst_52 = arith.constant dense<0.000000e+00> : vector<8x128xf32>
    %60 = tpu.matmul %58, %59, %cst_52 {dimension_numbers = #tpu.dot_dimension_numbers<[1], [0], [0], [1], [0, 0, 1, 1], [], []>} : vector<8x128xf32>, vector<128x128xf32>, vector<8x128xf32> -> vector<8x128xf32>
    %c0_53 = arith.constant 0 : index
    %c0_54 = arith.constant 0 : index
    %61 = vector.load %arg15[%c0_53, %c0_54] : memref<1x128xf32, #tpu.memory_space<vmem>>, vector<1x128xf32>
    %62 = vector.broadcast %61 : vector<1x128xf32> to vector<8x128xf32>
    %63 = arith.addf %60, %62 : vector<8x128xf32>
    %64 = tpu.concatenate %63, %43 in 1 : vector<8x128xf32>, vector<8x128xf32> -> vector<8x256xf32>
    %c0_55 = arith.constant 0 : index
    %c0_56 = arith.constant 0 : index
    %65 = vector.load %arg22[%c0_55, %c0_56] : memref<8x256xf32, #tpu.memory_space<vmem>>, vector<8x256xf32>
    tpu.vector_store %arg22[%c0_55, %c0_56], %64 {strides = array<i32>} : memref<8x256xf32, #tpu.memory_space<vmem>>, vector<8x256xf32>,
    return
  }
  func.func @transform_0(%arg0: i32) -> (i32, i32) {
    %c0_i32 = arith.constant 0 : i32
    %c0_i32_0 = arith.constant 0 : i32
    return %arg0, %c0_i32 : i32, i32
  }
  func.func @transform_1(%arg0: i32) -> (i32, i32) {
    %c0_i32 = arith.constant 0 : i32
    %c0_i32_0 = arith.constant 0 : i32
    return %arg0, %c0_i32 : i32, i32
  }
  func.func @transform_2(%arg0: i32) -> (i32, i32) {
    %c0_i32 = arith.constant 0 : i32
    %c0_i32_0 = arith.constant 0 : i32
    return %arg0, %c0_i32 : i32, i32
  }
  func.func @transform_3(%arg0: i32) -> (i32, i32) {
    %c0_i32 = arith.constant 0 : i32
    %c0_i32_0 = arith.constant 0 : i32
    %c0_i32_1 = arith.constant 0 : i32
    return %c0_i32, %c0_i32_0 : i32, i32
  }
  func.func @transform_4(%arg0: i32) -> (i32, i32) {
    %c0_i32 = arith.constant 0 : i32
    %c0_i32_0 = arith.constant 0 : i32
    %c0_i32_1 = arith.constant 0 : i32
    return %c0_i32, %c0_i32_0 : i32, i32
  }
  func.func @transform_5(%arg0: i32) -> (i32, i32) {
    %c0_i32 = arith.constant 0 : i32
    %c0_i32_0 = arith.constant 0 : i32
    %c0_i32_1 = arith.constant 0 : i32
    return %c0_i32, %c0_i32_0 : i32, i32
  }
  func.func @transform_6(%arg0: i32) -> (i32, i32) {
    %c0_i32 = arith.constant 0 : i32
    %c0_i32_0 = arith.constant 0 : i32
    %c0_i32_1 = arith.constant 0 : i32
    return %c0_i32, %c0_i32_0 : i32, i32
  }
  func.func @transform_7(%arg0: i32) -> (i32, i32) {
    %c0_i32 = arith.constant 0 : i32
    %c0_i32_0 = arith.constant 0 : i32
    %c0_i32_1 = arith.constant 0 : i32
    return %c0_i32, %c0_i32_0 : i32, i32
  }
  func.func @transform_8(%arg0: i32) -> (i32, i32) {
    %c0_i32 = arith.constant 0 : i32
    %c0_i32_0 = arith.constant 0 : i32
    %c0_i32_1 = arith.constant 0 : i32
    return %c0_i32, %c0_i32_0 : i32, i32
  }
  func.func @transform_9(%arg0: i32) -> (i32, i32) {
    %c0_i32 = arith.constant 0 : i32
    %c0_i32_0 = arith.constant 0 : i32
    %c0_i32_1 = arith.constant 0 : i32
    return %c0_i32, %c0_i32_0 : i32, i32
  }
  func.func @transform_10(%arg0: i32) -> (i32, i32) {
    %c0_i32 = arith.constant 0 : i32
    %c0_i32_0 = arith.constant 0 : i32
    %c0_i32_1 = arith.constant 0 : i32
    return %c0_i32, %c0_i32_0 : i32, i32
  }
  func.func @transform_11(%arg0: i32) -> (i32, i32) {
    %c0_i32 = arith.constant 0 : i32
    %c0_i32_0 = arith.constant 0 : i32
    %c0_i32_1 = arith.constant 0 : i32
    return %c0_i32, %c0_i32_0 : i32, i32
  }
  func.func @transform_12(%arg0: i32) -> (i32, i32) {
    %c0_i32 = arith.constant 0 : i32
    %c0_i32_0 = arith.constant 0 : i32
    %c0_i32_1 = arith.constant 0 : i32
    return %c0_i32, %c0_i32_0 : i32, i32
  }
  func.func @transform_13(%arg0: i32) -> (i32, i32) {
    %c0_i32 = arith.constant 0 : i32
    %c0_i32_0 = arith.constant 0 : i32
    %c0_i32_1 = arith.constant 0 : i32
    return %c0_i32, %c0_i32_0 : i32, i32
  }
  func.func @transform_14(%arg0: i32) -> (i32, i32) {
    %c0_i32 = arith.constant 0 : i32
    %c0_i32_0 = arith.constant 0 : i32
    %c0_i32_1 = arith.constant 0 : i32
    return %c0_i32, %c0_i32_0 : i32, i32
  }
  func.func @transform_15(%arg0: i32) -> (i32, i32) {
    %c0_i32 = arith.constant 0 : i32
    %c0_i32_0 = arith.constant 0 : i32
    %c0_i32_1 = arith.constant 0 : i32
    return %c0_i32, %c0_i32_0 : i32, i32
  }
  func.func @transform_16(%arg0: i32) -> (i32, i32) {
    %c0_i32 = arith.constant 0 : i32
    %c0_i32_0 = arith.constant 0 : i32
    %c0_i32_1 = arith.constant 0 : i32
    return %c0_i32, %c0_i32_0 : i32, i32
  }
  func.func @transform_17(%arg0: i32) -> (i32, i32) {
    %c0_i32 = arith.constant 0 : i32
    %c0_i32_0 = arith.constant 0 : i32
    %c0_i32_1 = arith.constant 0 : i32
    return %c0_i32, %c0_i32_0 : i32, i32
  }
  func.func @transform_18(%arg0: i32) -> (i32, i32) {
    %c0_i32 = arith.constant 0 : i32
    %c0_i32_0 = arith.constant 0 : i32
    %c0_i32_1 = arith.constant 0 : i32
    return %c0_i32, %c0_i32_0 : i32, i32
  }
  func.func @transform_19(%arg0: i32) -> (i32, i32) {
    %c0_i32 = arith.constant 0 : i32
    %c0_i32_0 = arith.constant 0 : i32
    %c0_i32_1 = arith.constant 0 : i32
    return %c0_i32, %c0_i32_0 : i32, i32
  }
  func.func @transform_20(%arg0: i32) -> (i32, i32) {
    %c0_i32 = arith.constant 0 : i32
    %c0_i32_0 = arith.constant 0 : i32
    %c0_i32_1 = arith.constant 0 : i32
    return %c0_i32, %c0_i32_0 : i32, i32
  }
  func.func @transform_21(%arg0: i32) -> (i32, i32) {
    %c0_i32 = arith.constant 0 : i32
    %c0_i32_0 = arith.constant 0 : i32
    return %arg0, %c0_i32 : i32, i32
  }
}

</mosaic_0001>

<llo_original>
// kernel: cic_forward.1
$region0: #{cic_forward.1}
  #allocation0 [shape = 'u32[]', space=smem, size = 0x4, offset = 0x4, fixed_abs, tag = 'smem constant byte address 0x4 - core index']
  #allocation1 [shape = 'u32[72,128]{1,0:T(1,128)}', space=vmem, size = 0x9000, scoped, tag = 'internal scratch']
  %s0 = inlined_call_operand.vmem [shape: f32[8,24], index: 0, kind: input, shape index: {}]
  %s1 = inlined_call_operand.vmem [shape: f32[8,24], index: 1, kind: input, shape index: {}]
  %s2 = inlined_call_operand.hbm [shape: f32[8,8], index: 2, kind: input, shape index: {}]
  %s3 = inlined_call_operand.hbm [shape: f32[24,128], index: 3, kind: input, shape index: {}]
  %s4 = inlined_call_operand.hbm [shape: f32[1,128], index: 4, kind: input, shape index: {}]
  %s5 = inlined_call_operand.hbm [shape: f32[128,128], index: 5, kind: input, shape index: {}]
  %s6 = inlined_call_operand.hbm [shape: f32[1,128], index: 6, kind: input, shape index: {}]
  %s7 = inlined_call_operand.hbm [shape: f32[128,128], index: 7, kind: input, shape index: {}]
  %s8 = inlined_call_operand.hbm [shape: f32[1,128], index: 8, kind: input, shape index: {}]
  %s9 = inlined_call_operand.hbm [shape: f32[8,128], index: 9, kind: input, shape index: {}]
  %s10 = inlined_call_operand.hbm [shape: f32[1,128], index: 10, kind: input, shape index: {}]
  %s11 = inlined_call_operand.hbm [shape: f32[128,128], index: 11, kind: input, shape index: {}]
  %s12 = inlined_call_operand.hbm [shape: f32[1,128], index: 12, kind: input, shape index: {}]
  %s13 = inlined_call_operand.hbm [shape: f32[128,128], index: 13, kind: input, shape index: {}]
  %s14 = inlined_call_operand.hbm [shape: f32[1,128], index: 14, kind: input, shape index: {}]
  %s15 = inlined_call_operand.hbm [shape: f32[256,128], index: 15, kind: input, shape index: {}]
  %s16 = inlined_call_operand.hbm [shape: f32[1,128], index: 16, kind: input, shape index: {}]
  %s17 = inlined_call_operand.hbm [shape: f32[128,128], index: 17, kind: input, shape index: {}]
  %s18 = inlined_call_operand.hbm [shape: f32[1,128], index: 18, kind: input, shape index: {}]
  %s19 = inlined_call_operand.hbm [shape: f32[128,128], index: 19, kind: input, shape index: {}]
  %s20 = inlined_call_operand.hbm [shape: f32[1,128], index: 20, kind: input, shape index: {}]
  %s21 = inlined_call_operand.vmem [shape: f32[8,256], index: 21, kind: output, shape index: {}]
  %s22 = sld [smem:[#allocation0]]
  $region170: #{cic_forward.1} parent=0
    _
  %s24 = ssub.s32 1, %s22
  %s25 = scalar_select 0, %s24, %s22
  $region1: #{cic_forward.1} parent=0
    #allocation2 [shape = 'u8[4096]{0}', space=vmem, size = 0x1000, scoped, tag = 'input window, operand 2, single buffered']
    #allocation3 [shape = 's32[1]{0}', space=sflag, size = 0x4, scoped, tag = 'scoped memory for cic_forward.1']
    #allocation4 [shape = 'u8[12288]{0}', space=vmem, size = 0x3000, scoped, tag = 'input window, operand 3, single buffered']
    #allocation5 [shape = 's32[1]{0}', space=sflag, size = 0x4, scoped, tag = 'scoped memory for cic_forward.1']
    #allocation6 [shape = 'u8[512]{0}', space=vmem, size = 0x400, scoped, tag = 'input window, operand 4, single buffered']
    #allocation7 [shape = 'u8[65536]{0}', space=vmem, size = 0x10000, scoped, tag = 'input window, operand 5, single buffered']
    #allocation8 [shape = 's32[1]{0}', space=sflag, size = 0x4, scoped, tag = 'scoped memory for cic_forward.1']
    #allocation9 [shape = 'u8[512]{0}', space=vmem, size = 0x400, scoped, tag = 'input window, operand 6, single buffered']
    #allocation10 [shape = 'u8[65536]{0}', space=vmem, size = 0x10000, scoped, tag = 'input window, operand 7, single buffered']
    #allocation11 [shape = 's32[1]{0}', space=sflag, size = 0x4, scoped, tag = 'scoped memory for cic_forward.1']
    #allocation12 [shape = 'u8[512]{0}', space=vmem, size = 0x400, scoped, tag = 'input window, operand 8, single buffered']
    #allocation13 [shape = 'u8[4096]{0}', space=vmem, size = 0x1000, scoped, tag = 'input window, operand 9, single buffered']
    #allocation14 [shape = 's32[1]{0}', space=sflag, size = 0x4, scoped, tag = 'scoped memory for cic_forward.1']
    #allocation15 [shape = 'u8[512]{0}', space=vmem, size = 0x400, scoped, tag = 'input window, operand 10, single buffered']
    #allocation16 [shape = 'u8[65536]{0}', space=vmem, size = 0x10000, scoped, tag = 'input window, operand 11, single buffered']
    #allocation17 [shape = 's32[1]{0}', space=sflag, size = 0x4, scoped, tag = 'scoped memory for cic_forward.1']
    #allocation18 [shape = 'u8[512]{0}', space=vmem, size = 0x400, scoped, tag = 'input window, operand 12, single buffered']
    #allocation19 [shape = 'u8[65536]{0}', space=vmem, size = 0x10000, scoped, tag = 'input window, operand 13, single buffered']
    #allocation20 [shape = 's32[1]{0}', space=sflag, size = 0x4, scoped, tag = 'scoped memory for cic_forward.1']
    #allocation21 [shape = 'u8[512]{0}', space=vmem, size = 0x400, scoped, tag = 'input window, operand 14, single buffered']
    #allocation22 [shape = 'u8[131072]{0}', space=vmem, size = 0x20000, scoped, tag = 'input window, operand 15, single buffered']
    #allocation23 [shape = 's32[1]{0}', space=sflag, size = 0x4, scoped, tag = 'scoped memory for cic_forward.1']
    #allocation24 [shape = 'u8[512]{0}', space=vmem, size = 0x400, scoped, tag = 'input window, operand 16, single buffered']
    #allocation25 [shape = 'u8[65536]{0}', space=vmem, size = 0x10000, scoped, tag = 'input window, operand 17, single buffered']
    #allocation26 [shape = 's32[1]{0}', space=sflag, size = 0x4, scoped, tag = 'scoped memory for cic_forward.1']
    #allocation27 [shape = 'u8[512]{0}', space=vmem, size = 0x400, scoped, tag = 'input window, operand 18, single buffered']
    #allocation28 [shape = 'u8[65536]{0}', space=vmem, size = 0x10000, scoped, tag = 'input window, operand 19, single buffered']
    #allocation29 [shape = 's32[1]{0}', space=sflag, size = 0x4, scoped, tag = 'scoped memory for cic_forward.1']
    #allocation30 [shape = 'u8[512]{0}', space=vmem, size = 0x400, scoped, tag = 'input window, operand 20, single buffered']
    %26 = vsyncpa [#allocation3], 0
    %27 = vsyncpa [#allocation5], 0
    %28 = vsyncpa [#allocation8], 0
    %29 = vsyncpa [#allocation11], 0
    %30 = vsyncpa [#allocation14], 0
    %31 = vsyncpa [#allocation17], 0
    %32 = vsyncpa [#allocation20], 0
    %33 = vsyncpa [#allocation23], 0
    %34 = vsyncpa [#allocation26], 0
    %35 = vsyncpa [#allocation29], 0
    // Predicated region
    $region2: #{cic_forward.1} parent=1 // pred_check
      _
    $region3: #{cic_forward.1} parent=1 // pred_check_branch
      %37 = sbr.rel (0) target = $region5
    $region4: #{cic_forward.1} parent=1 // pred_region
      _
    $region5: #{cic_forward.1} parent=1 // pred_fallthru
      _
    // Predicated region
    $region6: #{cic_forward.1} parent=1 // pred_check
      _
    $region7: #{cic_forward.1} parent=1 // pred_check_branch
      %39 = sbr.rel (0) target = $region9
    $region8: #{cic_forward.1} parent=1 // pred_region
      _
    $region9: #{cic_forward.1} parent=1 // pred_fallthru
      _
    // Predicated region
    $region10: #{cic_forward.1} parent=1 // pred_check
      _
    $region11: #{cic_forward.1} parent=1 // pred_check_branch
      %41 = sbr.rel (0) target = $region13
    $region12: #{cic_forward.1} parent=1 // pred_region
      %43 = vsyncadd [#allocation3], 0
      %s45 = sshll.u32 %s2, 4
      %s46 = int_to_ptr.hbm [resolvable:$true] %s45
      %s47 = sshll.u32 [#allocation2], 4
      %s48 = int_to_ptr.vmem [resolvable:$true] %s47
      %50 = dma.hbm_to_vmem [thread:$0]  %s46, 128, %s48, [#allocation3]
    $region13: #{cic_forward.1} parent=1 // pred_fallthru
      _
    // Predicated region
    $region14: #{cic_forward.1} parent=1 // pred_check
      _
    $region15: #{cic_forward.1} parent=1 // pred_check_branch
      %52 = sbr.rel (0) target = $region17
    $region16: #{cic_forward.1} parent=1 // pred_region
      %54 = vsyncadd [#allocation5], 0
      %s55 = sshll.u32 %s3, 4
      %s56 = int_to_ptr.hbm [resolvable:$true] %s55
      %s57 = sshll.u32 [#allocation4], 4
      %s58 = int_to_ptr.vmem [resolvable:$true] %s57
      %63 = dma.hbm_to_vmem [thread:$0]  %s56, 384, %s58, [#allocation5], 128, 128, 8
    $region17: #{cic_forward.1} parent=1 // pred_fallthru
      _
    // Predicated region
    $region18: #{cic_forward.1} parent=1 // pred_check
      _
    $region19: #{cic_forward.1} parent=1 // pred_check_branch
      %65 = sbr.rel (0) target = $region21
    $region20: #{cic_forward.1} parent=1 // pred_region
      %67 = vsyncadd [#allocation5], 0
      %s69 = sshll.u32 %s4, 4
      %s70 = int_to_ptr.hbm [resolvable:$true] %s69
      %s71 = sshll.u32 [#allocation6], 4
      %s72 = int_to_ptr.vmem [resolvable:$true] %s71
      %74 = dma.hbm_to_vmem [thread:$0]  %s70, 16, %s72, [#allocation5]
    $region21: #{cic_forward.1} parent=1 // pred_fallthru
      _
    // Predicated region
    $region22: #{cic_forward.1} parent=1 // pred_check
      _
    $region23: #{cic_forward.1} parent=1 // pred_check_branch
      %76 = sbr.rel (0) target = $region25
    $region24: #{cic_forward.1} parent=1 // pred_region
      %78 = vsyncadd [#allocation8], 0
      %s79 = sshll.u32 %s5, 4
      %s80 = int_to_ptr.hbm [resolvable:$true] %s79
      %s81 = sshll.u32 [#allocation7], 4
      %s82 = int_to_ptr.vmem [resolvable:$true] %s81
      %87 = dma.hbm_to_vmem [thread:$0]  %s80, 2048, %s82, [#allocation8], 128, 128, 8
    $region25: #{cic_forward.1} parent=1 // pred_fallthru
      _
    // Predicated region
    $region26: #{cic_forward.1} parent=1 // pred_check
      _
    $region27: #{cic_forward.1} parent=1 // pred_check_branch
      %89 = sbr.rel (0) target = $region29
    $region28: #{cic_forward.1} parent=1 // pred_region
      %91 = vsyncadd [#allocation8], 0
      %s93 = sshll.u32 %s6, 4
      %s94 = int_to_ptr.hbm [resolvable:$true] %s93
      %s95 = sshll.u32 [#allocation9], 4
      %s96 = int_to_ptr.vmem [resolvable:$true] %s95
      %98 = dma.hbm_to_vmem [thread:$0]  %s94, 16, %s96, [#allocation8]
    $region29: #{cic_forward.1} parent=1 // pred_fallthru
      _
    // Predicated region
    $region30: #{cic_forward.1} parent=1 // pred_check
      _
    $region31: #{cic_forward.1} parent=1 // pred_check_branch
      %100 = sbr.rel (0) target = $region33
    $region32: #{cic_forward.1} parent=1 // pred_region
      %102 = vsyncadd [#allocation11], 0
      %s103 = sshll.u32 %s7, 4
      %s104 = int_to_ptr.hbm [resolvable:$true] %s103
      %s105 = sshll.u32 [#allocation10], 4
      %s106 = int_to_ptr.vmem [resolvable:$true] %s105
      %111 = dma.hbm_to_vmem [thread:$0]  %s104, 2048, %s106, [#allocation11], 128, 128, 8
    $region33: #{cic_forward.1} parent=1 // pred_fallthru
      _
    // Predicated region
    $region34: #{cic_forward.1} parent=1 // pred_check
      _
    $region35: #{cic_forward.1} parent=1 // pred_check_branch
      %113 = sbr.rel (0) target = $region37
    $region36: #{cic_forward.1} parent=1 // pred_region
      %115 = vsyncadd [#allocation11], 0
      %s117 = sshll.u32 %s8, 4
      %s118 = int_to_ptr.hbm [resolvable:$true] %s117
      %s119 = sshll.u32 [#allocation12], 4
      %s120 = int_to_ptr.vmem [resolvable:$true] %s119
      %122 = dma.hbm_to_vmem [thread:$0]  %s118, 16, %s120, [#allocation11]
    $region37: #{cic_forward.1} parent=1 // pred_fallthru
      _
    // Predicated region
    $region38: #{cic_forward.1} parent=1 // pred_check
      _
    $region39: #{cic_forward.1} parent=1 // pred_check_branch
      %124 = sbr.rel (0) target = $region41
    $region40: #{cic_forward.1} parent=1 // pred_region
      %126 = vsyncadd [#allocation14], 0
      %s128 = sshll.u32 %s9, 4
      %s129 = int_to_ptr.hbm [resolvable:$true] %s128
      %s130 = sshll.u32 [#allocation13], 4
      %s131 = int_to_ptr.vmem [resolvable:$true] %s130
      %133 = dma.hbm_to_vmem [thread:$0]  %s129, 128, %s131, [#allocation14]
    $region41: #{cic_forward.1} parent=1 // pred_fallthru
      _
    // Predicated region
    $region42: #{cic_forward.1} parent=1 // pred_check
      _
    $region43: #{cic_forward.1} parent=1 // pred_check_branch
      %135 = sbr.rel (0) target = $region45
    $region44: #{cic_forward.1} parent=1 // pred_region
      %137 = vsyncadd [#allocation14], 0
      %s139 = sshll.u32 %s10, 4
      %s140 = int_to_ptr.hbm [resolvable:$true] %s139
      %s141 = sshll.u32 [#allocation15], 4
      %s142 = int_to_ptr.vmem [resolvable:$true] %s141
      %144 = dma.hbm_to_vmem [thread:$0]  %s140, 16, %s142, [#allocation14]
    $region45: #{cic_forward.1} parent=1 // pred_fallthru
      _
    // Predicated region
    $region46: #{cic_forward.1} parent=1 // pred_check
      _
    $region47: #{cic_forward.1} parent=1 // pred_check_branch
      %146 = sbr.rel (0) target = $region49
    $region48: #{cic_forward.1} parent=1 // pred_region
      %148 = vsyncadd [#allocation17], 0
      %s149 = sshll.u32 %s11, 4
      %s150 = int_to_ptr.hbm [resolvable:$true] %s149
      %s151 = sshll.u32 [#allocation16], 4
      %s152 = int_to_ptr.vmem [resolvable:$true] %s151
      %157 = dma.hbm_to_vmem [thread:$0]  %s150, 2048, %s152, [#allocation17], 128, 128, 8
    $region49: #{cic_forward.1} parent=1 // pred_fallthru
      _
    // Predicated region
    $region50: #{cic_forward.1} parent=1 // pred_check
      _
    $region51: #{cic_forward.1} parent=1 // pred_check_branch
      %159 = sbr.rel (0) target = $region53
    $region52: #{cic_forward.1} parent=1 // pred_region
      %161 = vsyncadd [#allocation17], 0
      %s163 = sshll.u32 %s12, 4
      %s164 = int_to_ptr.hbm [resolvable:$true] %s163
      %s165 = sshll.u32 [#allocation18], 4
      %s166 = int_to_ptr.vmem [resolvable:$true] %s165
      %168 = dma.hbm_to_vmem [thread:$0]  %s164, 16, %s166, [#allocation17]
    $region53: #{cic_forward.1} parent=1 // pred_fallthru
      _
    // Predicated region
    $region54: #{cic_forward.1} parent=1 // pred_check
      _
    $region55: #{cic_forward.1} parent=1 // pred_check_branch
      %170 = sbr.rel (0) target = $region57
    $region56: #{cic_forward.1} parent=1 // pred_region
      %172 = vsyncadd [#allocation20], 0
      %s173 = sshll.u32 %s13, 4
      %s174 = int_to_ptr.hbm [resolvable:$true] %s173
      %s175 = sshll.u32 [#allocation19], 4
      %s176 = int_to_ptr.vmem [resolvable:$true] %s175
      %181 = dma.hbm_to_vmem [thread:$0]  %s174, 2048, %s176, [#allocation20], 128, 128, 8
    $region57: #{cic_forward.1} parent=1 // pred_fallthru
      _
    // Predicated region
    $region58: #{cic_forward.1} parent=1 // pred_check
      _
    $region59: #{cic_forward.1} parent=1 // pred_check_branch
      %183 = sbr.rel (0) target = $region61
    $region60: #{cic_forward.1} parent=1 // pred_region
      %185 = vsyncadd [#allocation20], 0
      %s187 = sshll.u32 %s14, 4
      %s188 = int_to_ptr.hbm [resolvable:$true] %s187
      %s189 = sshll.u32 [#allocation21], 4
      %s190 = int_to_ptr.vmem [resolvable:$true] %s189
      %192 = dma.hbm_to_vmem [thread:$0]  %s188, 16, %s190, [#allocation20]
    $region61: #{cic_forward.1} parent=1 // pred_fallthru
      _
    // Predicated region
    $region62: #{cic_forward.1} parent=1 // pred_check
      _
    $region63: #{cic_forward.1} parent=1 // pred_check_branch
      %194 = sbr.rel (0) target = $region65
    $region64: #{cic_forward.1} parent=1 // pred_region
      %196 = vsyncadd [#allocation23], 0
      %s197 = sshll.u32 %s15, 4
      %s198 = int_to_ptr.hbm [resolvable:$true] %s197
      %s199 = sshll.u32 [#allocation22], 4
      %s200 = int_to_ptr.vmem [resolvable:$true] %s199
      %205 = dma.hbm_to_vmem [thread:$0]  %s198, 4096, %s200, [#allocation23], 128, 128, 8
    $region65: #{cic_forward.1} parent=1 // pred_fallthru
      _
    // Predicated region
    $region66: #{cic_forward.1} parent=1 // pred_check
      _
    $region67: #{cic_forward.1} parent=1 // pred_check_branch
      %207 = sbr.rel (0) target = $region69
    $region68: #{cic_forward.1} parent=1 // pred_region
      %209 = vsyncadd [#allocation23], 0
      %s211 = sshll.u32 %s16, 4
      %s212 = int_to_ptr.hbm [resolvable:$true] %s211
      %s213 = sshll.u32 [#allocation24], 4
      %s214 = int_to_ptr.vmem [resolvable:$true] %s213
      %216 = dma.hbm_to_vmem [thread:$0]  %s212, 16, %s214, [#allocation23]
    $region69: #{cic_forward.1} parent=1 // pred_fallthru
      _
    // Predicated region
    $region70: #{cic_forward.1} parent=1 // pred_check
      _
    $region71: #{cic_forward.1} parent=1 // pred_check_branch
      %218 = sbr.rel (0) target = $region73
    $region72: #{cic_forward.1} parent=1 // pred_region
      %220 = vsyncadd [#allocation26], 0
      %s221 = sshll.u32 %s17, 4
      %s222 = int_to_ptr.hbm [resolvable:$true] %s221
      %s223 = sshll.u32 [#allocation25], 4
      %s224 = int_to_ptr.vmem [resolvable:$true] %s223
      %229 = dma.hbm_to_vmem [thread:$0]  %s222, 2048, %s224, [#allocation26], 128, 128, 8
    $region73: #{cic_forward.1} parent=1 // pred_fallthru
      _
    // Predicated region
    $region74: #{cic_forward.1} parent=1 // pred_check
      _
    $region75: #{cic_forward.1} parent=1 // pred_check_branch
      %231 = sbr.rel (0) target = $region77
    $region76: #{cic_forward.1} parent=1 // pred_region
      %233 = vsyncadd [#allocation26], 0
      %s235 = sshll.u32 %s18, 4
      %s236 = int_to_ptr.hbm [resolvable:$true] %s235
      %s237 = sshll.u32 [#allocation27], 4
      %s238 = int_to_ptr.vmem [resolvable:$true] %s237
      %240 = dma.hbm_to_vmem [thread:$0]  %s236, 16, %s238, [#allocation26]
    $region77: #{cic_forward.1} parent=1 // pred_fallthru
      _
    // Predicated region
    $region78: #{cic_forward.1} parent=1 // pred_check
      _
    $region79: #{cic_forward.1} parent=1 // pred_check_branch
      %242 = sbr.rel (0) target = $region81
    $region80: #{cic_forward.1} parent=1 // pred_region
      %244 = vsyncadd [#allocation29], 0
      %s245 = sshll.u32 %s19, 4
      %s246 = int_to_ptr.hbm [resolvable:$true] %s245
      %s247 = sshll.u32 [#allocation28], 4
      %s248 = int_to_ptr.vmem [resolvable:$true] %s247
      %253 = dma.hbm_to_vmem [thread:$0]  %s246, 2048, %s248, [#allocation29], 128, 128, 8
    $region81: #{cic_forward.1} parent=1 // pred_fallthru
      _
    // Predicated region
    $region82: #{cic_forward.1} parent=1 // pred_check
      _
    $region83: #{cic_forward.1} parent=1 // pred_check_branch
      %255 = sbr.rel (0) target = $region85
    $region84: #{cic_forward.1} parent=1 // pred_region
      %257 = vsyncadd [#allocation29], 0
      %s259 = sshll.u32 %s20, 4
      %s260 = int_to_ptr.hbm [resolvable:$true] %s259
      %s261 = sshll.u32 [#allocation30], 4
      %s262 = int_to_ptr.vmem [resolvable:$true] %s261
      %264 = dma.hbm_to_vmem [thread:$0]  %s260, 16, %s262, [#allocation29]
    $region85: #{cic_forward.1} parent=1 // pred_fallthru
      _
    // Predicated region
    $region86: #{cic_forward.1} parent=1 // pred_check
      _
    $region87: #{cic_forward.1} parent=1 // pred_check_branch
      %266 = sbr.rel (0) target = $region89
    $region88: #{cic_forward.1} parent=1 // pred_region
      %268 = dma.done [#allocation3], 128
    $region89: #{cic_forward.1} parent=1 // pred_fallthru
      _
    // Predicated region
    $region90: #{cic_forward.1} parent=1 // pred_check
      _
    $region91: #{cic_forward.1} parent=1 // pred_check_branch
      %270 = sbr.rel (0) target = $region93
    $region92: #{cic_forward.1} parent=1 // pred_region
      %272 = dma.done [#allocation5], 384
    $region93: #{cic_forward.1} parent=1 // pred_fallthru
      _
    // Predicated region
    $region94: #{cic_forward.1} parent=1 // pred_check
      _
    $region95: #{cic_forward.1} parent=1 // pred_check_branch
      %274 = sbr.rel (0) target = $region97
    $region96: #{cic_forward.1} parent=1 // pred_region
      %276 = dma.done [#allocation5], 16
    $region97: #{cic_forward.1} parent=1 // pred_fallthru
      _
    // Predicated region
    $region98: #{cic_forward.1} parent=1 // pred_check
      _
    $region99: #{cic_forward.1} parent=1 // pred_check_branch
      %278 = sbr.rel (0) target = $region101
    $region100: #{cic_forward.1} parent=1 // pred_region
      %280 = dma.done [#allocation8], 2048
    $region101: #{cic_forward.1} parent=1 // pred_fallthru
      _
    // Predicated region
    $region102: #{cic_forward.1} parent=1 // pred_check
      _
    $region103: #{cic_forward.1} parent=1 // pred_check_branch
      %282 = sbr.rel (0) target = $region105
    $region104: #{cic_forward.1} parent=1 // pred_region
      %284 = dma.done [#allocation8], 16
    $region105: #{cic_forward.1} parent=1 // pred_fallthru
      _
    // Predicated region
    $region106: #{cic_forward.1} parent=1 // pred_check
      _
    $region107: #{cic_forward.1} parent=1 // pred_check_branch
      %286 = sbr.rel (0) target = $region109
    $region108: #{cic_forward.1} parent=1 // pred_region
      %288 = dma.done [#allocation11], 2048
    $region109: #{cic_forward.1} parent=1 // pred_fallthru
      _
    // Predicated region
    $region110: #{cic_forward.1} parent=1 // pred_check
      _
    $region111: #{cic_forward.1} parent=1 // pred_check_branch
      %290 = sbr.rel (0) target = $region113
    $region112: #{cic_forward.1} parent=1 // pred_region
      %292 = dma.done [#allocation11], 16
    $region113: #{cic_forward.1} parent=1 // pred_fallthru
      _
    // Predicated region
    $region114: #{cic_forward.1} parent=1 // pred_check
      _
    $region115: #{cic_forward.1} parent=1 // pred_check_branch
      %294 = sbr.rel (0) target = $region117
    $region116: #{cic_forward.1} parent=1 // pred_region
      %296 = dma.done [#allocation14], 128
    $region117: #{cic_forward.1} parent=1 // pred_fallthru
      _
    // Predicated region
    $region118: #{cic_forward.1} parent=1 // pred_check
      _
    $region119: #{cic_forward.1} parent=1 // pred_check_branch
      %298 = sbr.rel (0) target = $region121
    $region120: #{cic_forward.1} parent=1 // pred_region
      %300 = dma.done [#allocation14], 16
    $region121: #{cic_forward.1} parent=1 // pred_fallthru
      _
    // Predicated region
    $region122: #{cic_forward.1} parent=1 // pred_check
      _
    $region123: #{cic_forward.1} parent=1 // pred_check_branch
      %302 = sbr.rel (0) target = $region125
    $region124: #{cic_forward.1} parent=1 // pred_region
      %304 = dma.done [#allocation17], 2048
    $region125: #{cic_forward.1} parent=1 // pred_fallthru
      _
    // Predicated region
    $region126: #{cic_forward.1} parent=1 // pred_check
      _
    $region127: #{cic_forward.1} parent=1 // pred_check_branch
      %306 = sbr.rel (0) target = $region129
    $region128: #{cic_forward.1} parent=1 // pred_region
      %308 = dma.done [#allocation17], 16
    $region129: #{cic_forward.1} parent=1 // pred_fallthru
      _
    // Predicated region
    $region130: #{cic_forward.1} parent=1 // pred_check
      _
    $region131: #{cic_forward.1} parent=1 // pred_check_branch
      %310 = sbr.rel (0) target = $region133
    $region132: #{cic_forward.1} parent=1 // pred_region
      %312 = dma.done [#allocation20], 2048
    $region133: #{cic_forward.1} parent=1 // pred_fallthru
      _
    // Predicated region
    $region134: #{cic_forward.1} parent=1 // pred_check
      _
    $region135: #{cic_forward.1} parent=1 // pred_check_branch
      %314 = sbr.rel (0) target = $region137
    $region136: #{cic_forward.1} parent=1 // pred_region
      %316 = dma.done [#allocation20], 16
    $region137: #{cic_forward.1} parent=1 // pred_fallthru
      _
    // Predicated region
    $region138: #{cic_forward.1} parent=1 // pred_check
      _
    $region139: #{cic_forward.1} parent=1 // pred_check_branch
      %318 = sbr.rel (0) target = $region141
    $region140: #{cic_forward.1} parent=1 // pred_region
      %320 = dma.done [#allocation23], 4096
    $region141: #{cic_forward.1} parent=1 // pred_fallthru
      _
    // Predicated region
    $region142: #{cic_forward.1} parent=1 // pred_check
      _
    $region143: #{cic_forward.1} parent=1 // pred_check_branch
      %322 = sbr.rel (0) target = $region145
    $region144: #{cic_forward.1} parent=1 // pred_region
      %324 = dma.done [#allocation23], 16
    $region145: #{cic_forward.1} parent=1 // pred_fallthru
      _
    // Predicated region
    $region146: #{cic_forward.1} parent=1 // pred_check
      _
    $region147: #{cic_forward.1} parent=1 // pred_check_branch
      %326 = sbr.rel (0) target = $region149
    $region148: #{cic_forward.1} parent=1 // pred_region
      %328 = dma.done [#allocation26], 2048
    $region149: #{cic_forward.1} parent=1 // pred_fallthru
      _
    // Predicated region
    $region150: #{cic_forward.1} parent=1 // pred_check
      _
    $region151: #{cic_forward.1} parent=1 // pred_check_branch
      %330 = sbr.rel (0) target = $region153
    $region152: #{cic_forward.1} parent=1 // pred_region
      %332 = dma.done [#allocation26], 16
    $region153: #{cic_forward.1} parent=1 // pred_fallthru
      _
    // Predicated region
    $region154: #{cic_forward.1} parent=1 // pred_check
      _
    $region155: #{cic_forward.1} parent=1 // pred_check_branch
      %334 = sbr.rel (0) target = $region157
    $region156: #{cic_forward.1} parent=1 // pred_region
      %336 = dma.done [#allocation29], 2048
    $region157: #{cic_forward.1} parent=1 // pred_fallthru
      _
    // Predicated region
    $region158: #{cic_forward.1} parent=1 // pred_check
      _
    $region159: #{cic_forward.1} parent=1 // pred_check_branch
      %338 = sbr.rel (0) target = $region161
    $region160: #{cic_forward.1} parent=1 // pred_region
      %340 = dma.done [#allocation29], 16
    $region161: #{cic_forward.1} parent=1 // pred_fallthru
      _
    %v341 = vld [vmem:[%s0] sm:$0xff]
    %v342 = vld [vmem:[%s1] sm:$0xff]
    %v343 = vld [vmem:[#allocation4] sm:$0xff]
    %v344 = vld [vmem:[#allocation4 + $0x8] sm:$0xff]
    %v345 = vld [vmem:[#allocation4 + $0x10] sm:$0xff]
    %v346 = vld [vmem:[#allocation6] sm:$0x1]
    %v348 = vperm.slane %v346, 0
    %vm350 = vcmask 195584
    %v352 = vsel %vm350, %v341, 0
    %v355 = vsel %vm350, %v342, 0
    %357 = vmatpush.msra.mxu0 0.0
    %358 = vmatpush.msra.mxu0 0.0
    %359 = vmatpush.msra.mxu0 0.0
    %360 = vmatpush.msra.mxu0 0.0
    %361 = vmatpush.msra.mxu0 0.0
    %362 = vmatpush.msra.mxu0 0.0
    %363 = vmatpush.msra.mxu0 0.0
    %364 = vmatpush.msra.mxu0 0.0
    %365 = vmatpush.msra.mxu0 0.0
    %366 = vmatpush.msra.mxu0 0.0
    %367 = vmatpush.msra.mxu0 0.0
    %368 = vmatpush.msra.mxu0 0.0
    %369 = vmatpush.msra.mxu0 0.0
    %370 = vmatpush.msra.mxu0 %v345
    %371 = vmatpush.msra.mxu0 %v344
    %372 = vmatpush.msra.mxu0 %v343
    %373 = vmatmul.f32.gmra.mxu0 %v352
    %v374 = vpop.f32.mrf.mxu0
    %v375 = vadd.f32 %v348, %v374
    %376 = vmatmul.f32.gmra.mxu0 %v355
    %v377 = vpop.f32.mrf.mxu0
    %v378 = vadd.f32 %v348, %v377
    %379 = vdwg.mxu0
    %v380 = vmax.f32 %v375, 0.0
    %v381 = vmax.f32 %v378, 0.0
    %v382 = vld [vmem:[#allocation7] sm:$0xff]
    %v383 = vld [vmem:[#allocation7 + $0x8] sm:$0xff]
    %v384 = vld [vmem:[#allocation7 + $0x10] sm:$0xff]
    %v385 = vld [vmem:[#allocation7 + $0x18] sm:$0xff]
    %v386 = vld [vmem:[#allocation7 + $0x20] sm:$0xff]
    %v387 = vld [vmem:[#allocation7 + $0x28] sm:$0xff]
    %v388 = vld [vmem:[#allocation7 + $0x30] sm:$0xff]
    %v389 = vld [vmem:[#allocation7 + $0x38] sm:$0xff]
    %v390 = vld [vmem:[#allocation7 + $0x40] sm:$0xff]
    %v391 = vld [vmem:[#allocation7 + $0x48] sm:$0xff]
    %v392 = vld [vmem:[#allocation7 + $0x50] sm:$0xff]
    %v393 = vld [vmem:[#allocation7 + $0x58] sm:$0xff]
    %v394 = vld [vmem:[#allocation7 + $0x60] sm:$0xff]
    %v395 = vld [vmem:[#allocation7 + $0x68] sm:$0xff]
    %v396 = vld [vmem:[#allocation7 + $0x70] sm:$0xff]
    %v397 = vld [vmem:[#allocation7 + $0x78] sm:$0xff]
    %v398 = vld [vmem:[#allocation9] sm:$0x1]
    %v400 = vperm.slane %v398, 0
    %402 = vmatpush.msra.mxu0 %v397
    %403 = vmatpush.msra.mxu0 %v396
    %404 = vmatpush.msra.mxu0 %v395
    %405 = vmatpush.msra.mxu0 %v394
    %406 = vmatpush.msra.mxu0 %v393
    %407 = vmatpush.msra.mxu0 %v392
    %408 = vmatpush.msra.mxu0 %v391
    %409 = vmatpush.msra.mxu0 %v390
    %410 = vmatpush.msra.mxu0 %v389
    %411 = vmatpush.msra.mxu0 %v388
    %412 = vmatpush.msra.mxu0 %v387
    %413 = vmatpush.msra.mxu0 %v386
    %414 = vmatpush.msra.mxu0 %v385
    %415 = vmatpush.msra.mxu0 %v384
    %416 = vmatpush.msra.mxu0 %v383
    %417 = vmatpush.msra.mxu0 %v382
    %418 = vmatmul.f32.gmra.mxu0 %v380
    %v419 = vpop.f32.mrf.mxu0
    %v420 = vadd.f32 %v400, %v419
    %421 = vmatmul.f32.gmra.mxu0 %v381
    %v422 = vpop.f32.mrf.mxu0
    %v423 = vadd.f32 %v400, %v422
    %424 = vdwg.mxu0
    %v425 = vmax.f32 %v420, 0.0
    %v426 = vmax.f32 %v423, 0.0
    %v427 = vld [vmem:[#allocation10] sm:$0xff]
    %v428 = vld [vmem:[#allocation10 + $0x8] sm:$0xff]
    %v429 = vld [vmem:[#allocation10 + $0x10] sm:$0xff]
    %v430 = vld [vmem:[#allocation10 + $0x18] sm:$0xff]
    %v431 = vld [vmem:[#allocation10 + $0x20] sm:$0xff]
    %v432 = vld [vmem:[#allocation10 + $0x28] sm:$0xff]
    %v433 = vld [vmem:[#allocation10 + $0x30] sm:$0xff]
    %v434 = vld [vmem:[#allocation10 + $0x38] sm:$0xff]
    %v435 = vld [vmem:[#allocation10 + $0x40] sm:$0xff]
    %v436 = vld [vmem:[#allocation10 + $0x48] sm:$0xff]
    %v437 = vld [vmem:[#allocation10 + $0x50] sm:$0xff]
    %v438 = vld [vmem:[#allocation10 + $0x58] sm:$0xff]
    %v439 = vld [vmem:[#allocation10 + $0x60] sm:$0xff]
    %v440 = vld [vmem:[#allocation10 + $0x68] sm:$0xff]
    %v441 = vld [vmem:[#allocation10 + $0x70] sm:$0xff]
    %v442 = vld [vmem:[#allocation10 + $0x78] sm:$0xff]
    %v443 = vld [vmem:[#allocation12] sm:$0x1]
    %v445 = vperm.slane %v443, 0
    %447 = vmatpush.msra.mxu0 %v442
    %448 = vmatpush.msra.mxu0 %v441
    %449 = vmatpush.msra.mxu0 %v440
    %450 = vmatpush.msra.mxu0 %v439
    %451 = vmatpush.msra.mxu0 %v438
    %452 = vmatpush.msra.mxu0 %v437
    %453 = vmatpush.msra.mxu0 %v436
    %454 = vmatpush.msra.mxu0 %v435
    %455 = vmatpush.msra.mxu0 %v434
    %456 = vmatpush.msra.mxu0 %v433
    %457 = vmatpush.msra.mxu0 %v432
    %458 = vmatpush.msra.mxu0 %v431
    %459 = vmatpush.msra.mxu0 %v430
    %460 = vmatpush.msra.mxu0 %v429
    %461 = vmatpush.msra.mxu0 %v428
    %462 = vmatpush.msra.mxu0 %v427
    %463 = vmatmul.f32.gmra.mxu0 %v425
    %v464 = vpop.f32.mrf.mxu0
    %v465 = vadd.f32 %v445, %v464
    %466 = vmatmul.f32.gmra.mxu0 %v426
    %v467 = vpop.f32.mrf.mxu0
    %v468 = vadd.f32 %v445, %v467
    %469 = vdwg.mxu0
    %v470 = vld [vmem:[#allocation22] sm:$0xff]
    %v471 = vld [vmem:[#allocation22 + $0x8] sm:$0xff]
    %v472 = vld [vmem:[#allocation22 + $0x10] sm:$0xff]
    %v473 = vld [vmem:[#allocation22 + $0x18] sm:$0xff]
    %v474 = vld [vmem:[#allocation22 + $0x20] sm:$0xff]
    %v475 = vld [vmem:[#allocation22 + $0x28] sm:$0xff]
    %v476 = vld [vmem:[#allocation22 + $0x30] sm:$0xff]
    %v477 = vld [vmem:[#allocation22 + $0x38] sm:$0xff]
    %v478 = vld [vmem:[#allocation22 + $0x40] sm:$0xff]
    %v479 = vld [vmem:[#allocation22 + $0x48] sm:$0xff]
    %v480 = vld [vmem:[#allocation22 + $0x50] sm:$0xff]
    %v481 = vld [vmem:[#allocation22 + $0x58] sm:$0xff]
    %v482 = vld [vmem:[#allocation22 + $0x60] sm:$0xff]
    %v483 = vld [vmem:[#allocation22 + $0x68] sm:$0xff]
    %v484 = vld [vmem:[#allocation22 + $0x70] sm:$0xff]
    %v485 = vld [vmem:[#allocation22 + $0x78] sm:$0xff]
    %v486 = vld [vmem:[#allocation22 + $0x80] sm:$0xff]
    %v487 = vld [vmem:[#allocation22 + $0x88] sm:$0xff]
    %v488 = vld [vmem:[#allocation22 + $0x90] sm:$0xff]
    %v489 = vld [vmem:[#allocation22 + $0x98] sm:$0xff]
    %v490 = vld [vmem:[#allocation22 + $0xa0] sm:$0xff]
    %v491 = vld [vmem:[#allocation22 + $0xa8] sm:$0xff]
    %v492 = vld [vmem:[#allocation22 + $0xb0] sm:$0xff]
    %v493 = vld [vmem:[#allocation22 + $0xb8] sm:$0xff]
    %v494 = vld [vmem:[#allocation22 + $0xc0] sm:$0xff]
    %v495 = vld [vmem:[#allocation22 + $0xc8] sm:$0xff]
    %v496 = vld [vmem:[#allocation22 + $0xd0] sm:$0xff]
    %v497 = vld [vmem:[#allocation22 + $0xd8] sm:$0xff]
    %v498 = vld [vmem:[#allocation22 + $0xe0] sm:$0xff]
    %v499 = vld [vmem:[#allocation22 + $0xe8] sm:$0xff]
    %v500 = vld [vmem:[#allocation22 + $0xf0] sm:$0xff]
    %v501 = vld [vmem:[#allocation22 + $0xf8] sm:$0xff]
    %v502 = vld [vmem:[#allocation24] sm:$0x1]
    %v504 = vperm.slane %v502, 0
    %506 = vmatpush.msra.mxu0 %v485
    %507 = vmatpush.msra.mxu0 %v484
    %508 = vmatpush.msra.mxu0 %v483
    %509 = vmatpush.msra.mxu0 %v482
    %510 = vmatpush.msra.mxu0 %v481
    %511 = vmatpush.msra.mxu0 %v480
    %512 = vmatpush.msra.mxu0 %v479
    %513 = vmatpush.msra.mxu0 %v478
    %514 = vmatpush.msra.mxu0 %v477
    %515 = vmatpush.msra.mxu0 %v476
    %516 = vmatpush.msra.mxu0 %v475
    %517 = vmatpush.msra.mxu0 %v474
    %518 = vmatpush.msra.mxu0 %v473
    %519 = vmatpush.msra.mxu0 %v472
    %520 = vmatpush.msra.mxu0 %v471
    %521 = vmatpush.msra.mxu0 %v470
    %522 = vmatmul.f32.gmra.mxu0 %v465
    %v523 = vpop.f32.mrf.mxu0
    %v524 = vadd.f32 %v504, %v523
    %525 = vdwg.mxu0
    %526 = vmatpush.msra.mxu0 %v501
    %527 = vmatpush.msra.mxu0 %v500
    %528 = vmatpush.msra.mxu0 %v499
    %529 = vmatpush.msra.mxu0 %v498
    %530 = vmatpush.msra.mxu0 %v497
    %531 = vmatpush.msra.mxu0 %v496
    %532 = vmatpush.msra.mxu0 %v495
    %533 = vmatpush.msra.mxu0 %v494
    %534 = vmatpush.msra.mxu0 %v493
    %535 = vmatpush.msra.mxu0 %v492
    %536 = vmatpush.msra.mxu0 %v491
    %537 = vmatpush.msra.mxu0 %v490
    %538 = vmatpush.msra.mxu0 %v489
    %539 = vmatpush.msra.mxu0 %v488
    %540 = vmatpush.msra.mxu0 %v487
    %541 = vmatpush.msra.mxu0 %v486
    %542 = vmatmul.f32.gmra.mxu0 %v468
    %v543 = vpop.f32.mrf.mxu0
    %v544 = vadd.f32 %v524, %v543
    %545 = vdwg.mxu0
    %v546 = vmax.f32 %v544, 0.0
    %v547 = vld [vmem:[#allocation25] sm:$0xff]
    %v548 = vld [vmem:[#allocation25 + $0x8] sm:$0xff]
    %v549 = vld [vmem:[#allocation25 + $0x10] sm:$0xff]
    %v550 = vld [vmem:[#allocation25 + $0x18] sm:$0xff]
    %v551 = vld [vmem:[#allocation25 + $0x20] sm:$0xff]
    %v552 = vld [vmem:[#allocation25 + $0x28] sm:$0xff]
    %v553 = vld [vmem:[#allocation25 + $0x30] sm:$0xff]
    %v554 = vld [vmem:[#allocation25 + $0x38] sm:$0xff]
    %v555 = vld [vmem:[#allocation25 + $0x40] sm:$0xff]
    %v556 = vld [vmem:[#allocation25 + $0x48] sm:$0xff]
    %v557 = vld [vmem:[#allocation25 + $0x50] sm:$0xff]
    %v558 = vld [vmem:[#allocation25 + $0x58] sm:$0xff]
    %v559 = vld [vmem:[#allocation25 + $0x60] sm:$0xff]
    %v560 = vld [vmem:[#allocation25 + $0x68] sm:$0xff]
    %v561 = vld [vmem:[#allocation25 + $0x70] sm:$0xff]
    %v562 = vld [vmem:[#allocation25 + $0x78] sm:$0xff]
    %v563 = vld [vmem:[#allocation27] sm:$0x1]
    %v565 = vperm.slane %v563, 0
    %567 = vmatpush.msra.mxu0 %v562
    %568 = vmatpush.msra.mxu0 %v561
    %569 = vmatpush.msra.mxu0 %v560
    %570 = vmatpush.msra.mxu0 %v559
    %571 = vmatpush.msra.mxu0 %v558
    %572 = vmatpush.msra.mxu0 %v557
    %573 = vmatpush.msra.mxu0 %v556
    %574 = vmatpush.msra.mxu0 %v555
    %575 = vmatpush.msra.mxu0 %v554
    %576 = vmatpush.msra.mxu0 %v553
    %577 = vmatpush.msra.mxu0 %v552
    %578 = vmatpush.msra.mxu0 %v551
    %579 = vmatpush.msra.mxu0 %v550
    %580 = vmatpush.msra.mxu0 %v549
    %581 = vmatpush.msra.mxu0 %v548
    %582 = vmatpush.msra.mxu0 %v547
    %583 = vmatmul.f32.gmra.mxu0 %v546
    %v584 = vpop.f32.mrf.mxu0
    %v585 = vadd.f32 %v565, %v584
    %586 = vdwg.mxu0
    %v587 = vmax.f32 %v585, 0.0
    %v588 = vld [vmem:[#allocation28] sm:$0xff]
    %v589 = vld [vmem:[#allocation28 + $0x8] sm:$0xff]
    %v590 = vld [vmem:[#allocation28 + $0x10] sm:$0xff]
    %v591 = vld [vmem:[#allocation28 + $0x18] sm:$0xff]
    %v592 = vld [vmem:[#allocation28 + $0x20] sm:$0xff]
    %v593 = vld [vmem:[#allocation28 + $0x28] sm:$0xff]
    %v594 = vld [vmem:[#allocation28 + $0x30] sm:$0xff]
    %v595 = vld [vmem:[#allocation28 + $0x38] sm:$0xff]
    %v596 = vld [vmem:[#allocation28 + $0x40] sm:$0xff]
    %v597 = vld [vmem:[#allocation28 + $0x48] sm:$0xff]
    %v598 = vld [vmem:[#allocation28 + $0x50] sm:$0xff]
    %v599 = vld [vmem:[#allocation28 + $0x58] sm:$0xff]
    %v600 = vld [vmem:[#allocation28 + $0x60] sm:$0xff]
    %v601 = vld [vmem:[#allocation28 + $0x68] sm:$0xff]
    %v602 = vld [vmem:[#allocation28 + $0x70] sm:$0xff]
    %v603 = vld [vmem:[#allocation28 + $0x78] sm:$0xff]
    %v604 = vld [vmem:[#allocation30] sm:$0x1]
    %v606 = vperm.slane %v604, 0
    %608 = vmatpush.msra.mxu0 %v603
    %609 = vmatpush.msra.mxu0 %v602
    %610 = vmatpush.msra.mxu0 %v601
    %611 = vmatpush.msra.mxu0 %v600
    %612 = vmatpush.msra.mxu0 %v599
    %613 = vmatpush.msra.mxu0 %v598
    %614 = vmatpush.msra.mxu0 %v597
    %615 = vmatpush.msra.mxu0 %v596
    %616 = vmatpush.msra.mxu0 %v595
    %617 = vmatpush.msra.mxu0 %v594
    %618 = vmatpush.msra.mxu0 %v593
    %619 = vmatpush.msra.mxu0 %v592
    %620 = vmatpush.msra.mxu0 %v591
    %621 = vmatpush.msra.mxu0 %v590
    %622 = vmatpush.msra.mxu0 %v589
    %623 = vmatpush.msra.mxu0 %v588
    %624 = vmatmul.f32.gmra.mxu0 %v587
    %v625 = vpop.f32.mrf.mxu0
    %v626 = vadd.f32 %v606, %v625
    %627 = vdwg.mxu0
    %v628 = vld [vmem:[#allocation2] sm:$0xff]
    %v629 = vld [vmem:[#allocation13] sm:$0xff]
    %v630 = vld [vmem:[#allocation15] sm:$0x1]
    %v632 = vperm.slane %v630, 0
    %vm634 = vcmask 64512
    %v636 = vsel %vm634, %v628, 0
    %638 = vmatpush.msra.mxu0 0.0
    %639 = vmatpush.msra.mxu0 0.0
    %640 = vmatpush.msra.mxu0 0.0
    %641 = vmatpush.msra.mxu0 0.0
    %642 = vmatpush.msra.mxu0 0.0
    %643 = vmatpush.msra.mxu0 0.0
    %644 = vmatpush.msra.mxu0 0.0
    %645 = vmatpush.msra.mxu0 0.0
    %646 = vmatpush.msra.mxu0 0.0
    %647 = vmatpush.msra.mxu0 0.0
    %648 = vmatpush.msra.mxu0 0.0
    %649 = vmatpush.msra.mxu0 0.0
    %650 = vmatpush.msra.mxu0 0.0
    %651 = vmatpush.msra.mxu0 0.0
    %652 = vmatpush.msra.mxu0 0.0
    %653 = vmatpush.msra.mxu0 %v629
    %654 = vmatmul.f32.gmra.mxu0 %v636
    %v655 = vpop.f32.mrf.mxu0
    %v656 = vadd.f32 %v632, %v655
    %657 = vdwg.mxu0
    %v658 = vmax.f32 %v656, 0.0
    %v659 = vld [vmem:[#allocation16] sm:$0xff]
    %v660 = vld [vmem:[#allocation16 + $0x8] sm:$0xff]
    %v661 = vld [vmem:[#allocation16 + $0x10] sm:$0xff]
    %v662 = vld [vmem:[#allocation16 + $0x18] sm:$0xff]
    %v663 = vld [vmem:[#allocation16 + $0x20] sm:$0xff]
    %v664 = vld [vmem:[#allocation16 + $0x28] sm:$0xff]
    %v665 = vld [vmem:[#allocation16 + $0x30] sm:$0xff]
    %v666 = vld [vmem:[#allocation16 + $0x38] sm:$0xff]
    %v667 = vld [vmem:[#allocation16 + $0x40] sm:$0xff]
    %v668 = vld [vmem:[#allocation16 + $0x48] sm:$0xff]
    %v669 = vld [vmem:[#allocation16 + $0x50] sm:$0xff]
    %v670 = vld [vmem:[#allocation16 + $0x58] sm:$0xff]
    %v671 = vld [vmem:[#allocation16 + $0x60] sm:$0xff]
    %v672 = vld [vmem:[#allocation16 + $0x68] sm:$0xff]
    %v673 = vld [vmem:[#allocation16 + $0x70] sm:$0xff]
    %v674 = vld [vmem:[#allocation16 + $0x78] sm:$0xff]
    %v675 = vld [vmem:[#allocation18] sm:$0x1]
    %v677 = vperm.slane %v675, 0
    %679 = vmatpush.msra.mxu0 %v674
    %680 = vmatpush.msra.mxu0 %v673
    %681 = vmatpush.msra.mxu0 %v672
    %682 = vmatpush.msra.mxu0 %v671
    %683 = vmatpush.msra.mxu0 %v670
    %684 = vmatpush.msra.mxu0 %v669
    %685 = vmatpush.msra.mxu0 %v668
    %686 = vmatpush.msra.mxu0 %v667
    %687 = vmatpush.msra.mxu0 %v666
    %688 = vmatpush.msra.mxu0 %v665
    %689 = vmatpush.msra.mxu0 %v664
    %690 = vmatpush.msra.mxu0 %v663
    %691 = vmatpush.msra.mxu0 %v662
    %692 = vmatpush.msra.mxu0 %v661
    %693 = vmatpush.msra.mxu0 %v660
    %694 = vmatpush.msra.mxu0 %v659
    %695 = vmatmul.f32.gmra.mxu0 %v658
    %v696 = vpop.f32.mrf.mxu0
    %v697 = vadd.f32 %v677, %v696
    %698 = vdwg.mxu0
    %v699 = vmax.f32 %v697, 0.0
    %v700 = vld [vmem:[#allocation19] sm:$0xff]
    %v701 = vld [vmem:[#allocation19 + $0x8] sm:$0xff]
    %v702 = vld [vmem:[#allocation19 + $0x10] sm:$0xff]
    %v703 = vld [vmem:[#allocation19 + $0x18] sm:$0xff]
    %v704 = vld [vmem:[#allocation19 + $0x20] sm:$0xff]
    %v705 = vld [vmem:[#allocation19 + $0x28] sm:$0xff]
    %v706 = vld [vmem:[#allocation19 + $0x30] sm:$0xff]
    %v707 = vld [vmem:[#allocation19 + $0x38] sm:$0xff]
    %v708 = vld [vmem:[#allocation19 + $0x40] sm:$0xff]
    %v709 = vld [vmem:[#allocation19 + $0x48] sm:$0xff]
    %v710 = vld [vmem:[#allocation19 + $0x50] sm:$0xff]
    %v711 = vld [vmem:[#allocation19 + $0x58] sm:$0xff]
    %v712 = vld [vmem:[#allocation19 + $0x60] sm:$0xff]
    %v713 = vld [vmem:[#allocation19 + $0x68] sm:$0xff]
    %v714 = vld [vmem:[#allocation19 + $0x70] sm:$0xff]
    %v715 = vld [vmem:[#allocation19 + $0x78] sm:$0xff]
    %v716 = vld [vmem:[#allocation21] sm:$0x1]
    %v718 = vperm.slane %v716, 0
    %720 = vmatpush.msra.mxu0 %v715
    %721 = vmatpush.msra.mxu0 %v714
    %722 = vmatpush.msra.mxu0 %v713
    %723 = vmatpush.msra.mxu0 %v712
    %724 = vmatpush.msra.mxu0 %v711
    %725 = vmatpush.msra.mxu0 %v710
    %726 = vmatpush.msra.mxu0 %v709
    %727 = vmatpush.msra.mxu0 %v708
    %728 = vmatpush.msra.mxu0 %v707
    %729 = vmatpush.msra.mxu0 %v706
    %730 = vmatpush.msra.mxu0 %v705
    %731 = vmatpush.msra.mxu0 %v704
    %732 = vmatpush.msra.mxu0 %v703
    %733 = vmatpush.msra.mxu0 %v702
    %734 = vmatpush.msra.mxu0 %v701
    %735 = vmatpush.msra.mxu0 %v700
    %736 = vmatmul.f32.gmra.mxu0 %v699
    %v737 = vpop.f32.mrf.mxu0
    %v738 = vadd.f32 %v718, %v737
    %739 = vdwg.mxu0
    %740 = vst [vmem:[%s21] sm:$0xff] %v738
    %741 = vst [vmem:[%s21 + $0x8] sm:$0xff] %v626
    // Predicated region
    $region162: #{cic_forward.1} parent=1 // pred_check
      _
    $region163: #{cic_forward.1} parent=1 // pred_check_branch
      %743 = sbr.rel (0) target = $region165
    $region164: #{cic_forward.1} parent=1 // pred_region
      _
    $region165: #{cic_forward.1} parent=1 // pred_fallthru
      _
    // Predicated region
    $region166: #{cic_forward.1} parent=1 // pred_check
      _
    $region167: #{cic_forward.1} parent=1 // pred_check_branch
      %745 = sbr.rel (0) target = $region169
    $region168: #{cic_forward.1} parent=1 // pred_region
      _
    $region169: #{cic_forward.1} parent=1 // pred_fallthru
      _
    %746 = vsyncpa [#allocation3], 1
    %747 = vsyncpa [#allocation5], 1
    %748 = vsyncpa [#allocation8], 1
    %749 = vsyncpa [#allocation11], 1
    %750 = vsyncpa [#allocation14], 1
    %751 = vsyncpa [#allocation17], 1
    %752 = vsyncpa [#allocation20], 1
    %753 = vsyncpa [#allocation23], 1
    %754 = vsyncpa [#allocation26], 1
    %755 = vsyncpa [#allocation29], 1

</llo_original>
